<compile_context>
chip_gen: v5e
topology: v5e:2x2
jax: 0.10.0
libtpu: 0.0.40
codegen_flags: <defaults>
</compile_context>

<pallas_src>
import math
from functools import partial

import jax
import jax.numpy as jnp
from jax.experimental import pallas as pl
from jax.experimental.pallas import tpu as pltpu


# ----------------------------------------------------------------------------
# helpers
# ----------------------------------------------------------------------------
def _round_up(x, m):
    return (x + m - 1) // m * m


# ----------------------------------------------------------------------------
# Pallas matmul kernel:  out = act( A @ B + bias [+ residual] )
#   A, B, residual are bf16; accumulation / bias / epilogue math is f32.
# ----------------------------------------------------------------------------
def _apply_act(r, act, alpha):
    if act == "relu":
        return jnp.maximum(r, 0.0)
    if act == "prelu":
        return jnp.where(r >= 0.0, r, alpha * r)
    return r


def _mm_kernel(a_ref, b_ref, bi_ref, o_ref, acc_ref, *, act, alpha):
    @pl.when(pl.program_id(2) == 0)
    def _():
        acc_ref[...] = jnp.zeros_like(acc_ref)

    acc_ref[...] += jnp.dot(a_ref[...], b_ref[...],
                            preferred_element_type=jnp.float32)

    @pl.when(pl.program_id(2) == pl.num_programs(2) - 1)
    def _():
        r = acc_ref[...] + bi_ref[...]
        o_ref[...] = _apply_act(r, act, alpha).astype(o_ref.dtype)


def _mm_res_kernel(a_ref, b_ref, bi_ref, r_ref, o_ref, acc_ref, *, act, alpha):
    @pl.when(pl.program_id(2) == 0)
    def _():
        acc_ref[...] = jnp.zeros_like(acc_ref)

    acc_ref[...] += jnp.dot(a_ref[...], b_ref[...],
                            preferred_element_type=jnp.float32)

    @pl.when(pl.program_id(2) == pl.num_programs(2) - 1)
    def _():
        r = acc_ref[...] + bi_ref[...] + r_ref[...].astype(jnp.float32)
        o_ref[...] = _apply_act(r, act, alpha).astype(o_ref.dtype)


def _pick_tiles(M, N, K):
    # shrink tm when M is small (avoid padded MXU rows); 128 for big M.
    tm = _round_up(M, 16) if M <= 256 else 128
    # wide N tiles feed the 256-wide MXU on v6e/v7x; 128 floor.
    tn = 256 if N >= 256 else 128
    # large K tiles (<=2048) for the long-K ASPP / layer4 matmuls, chosen to
    # minimise K padding.
    Kr = _round_up(K, 128)
    k_steps = -(-Kr // 2048)
    tk = _round_up(-(-Kr // k_steps), 128)
    return tm, tn, tk


def matmul_bias(a, b, bias, act="none", residual=None, alpha=0.25,
                out_dtype=jnp.bfloat16):
    M, K = a.shape
    K2, N = b.shape
    assert K == K2
    tm, tn, tk = _pick_tiles(M, N, K)
    Mp, Np, Kp = _round_up(M, tm), _round_up(N, tn), _round_up(K, tk)

    a_p = jnp.pad(a.astype(jnp.bfloat16), ((0, Mp - M), (0, Kp - K)))
    b_p = jnp.pad(b.astype(jnp.bfloat16), ((0, Kp - K), (0, Np - N)))
    bi_p = jnp.pad(bias.astype(jnp.float32), (0, Np - N)).reshape(1, Np)

    in_specs = [
        pl.BlockSpec((tm, tk), lambda i, j, k: (i, k)),
        pl.BlockSpec((tk, tn), lambda i, j, k: (k, j)),
        pl.BlockSpec((1, tn), lambda i, j, k: (0, j)),
    ]
    inputs = [a_p, b_p, bi_p]
    if residual is not None:
        r_p = jnp.pad(residual.astype(jnp.bfloat16),
                      ((0, Mp - M), (0, Np - N)))
        in_specs.append(pl.BlockSpec((tm, tn), lambda i, j, k: (i, j)))
        inputs.append(r_p)
        kernel = partial(_mm_res_kernel, act=act, alpha=alpha)
    else:
        kernel = partial(_mm_kernel, act=act, alpha=alpha)

    out = pl.pallas_call(
        kernel,
        out_shape=jax.ShapeDtypeStruct((Mp, Np), out_dtype),
        grid_spec=pltpu.PrefetchScalarGridSpec(
            num_scalar_prefetch=0,
            grid=(Mp // tm, Np // tn, Kp // tk),
            in_specs=in_specs,
            out_specs=pl.BlockSpec((tm, tn), lambda i, j, k: (i, j)),
            scratch_shapes=[pltpu.VMEM((tm, tn), jnp.float32)],
        ),
        compiler_params=pltpu.CompilerParams(
            dimension_semantics=("parallel", "parallel", "arbitrary")),
    )(*inputs)
    return out[:M, :N]


# ----------------------------------------------------------------------------
# gridded elementwise Pallas kernel (lane-dense, pipelined tiles)
# ----------------------------------------------------------------------------
def _ew_call(fn, *xs):
    shape, dtype = xs[0].shape, xs[0].dtype
    n = xs[0].size
    lane = 128
    rows = max(1, -(-n // lane))
    block_rows = min(512, _round_up(rows, 16))
    rows_p = _round_up(rows, block_rows)
    total = rows_p * lane
    xs2 = [jnp.pad(x.reshape(-1), (0, total - n)).reshape(rows_p, lane)
           for x in xs]

    def kernel(*refs):
        out_ref = refs[-1]
        out_ref[...] = fn(*[r[...] for r in refs[:-1]]).astype(out_ref.dtype)

    out = pl.pallas_call(
        kernel,
        out_shape=jax.ShapeDtypeStruct((rows_p, lane), dtype),
        grid=(rows_p // block_rows,),
        in_specs=[pl.BlockSpec((block_rows, lane), lambda i: (i, 0))
                  for _ in xs2],
        out_specs=pl.BlockSpec((block_rows, lane), lambda i: (i, 0)),
        compiler_params=pltpu.CompilerParams(
            dimension_semantics=("parallel",)),
    )(*xs2)
    return out.reshape(-1)[:n].reshape(shape)


# ----------------------------------------------------------------------------
# conv = im2col (NHWC glue; 1x1 is a pure reshape) + Pallas matmul (hot path)
# ----------------------------------------------------------------------------
def _im2col_nhwc(x, kh, kw, stride, padding, dilation):
    B, H, W, C = x.shape
    if kh == 1 and kw == 1 and padding == 0:
        if stride > 1:
            x = x[:, ::stride, ::stride, :]
        B, Ho, Wo, C = x.shape
        return x.reshape(B * Ho * Wo, C), (B, Ho, Wo)
    xp = jnp.pad(x, ((0, 0), (padding, padding), (padding, padding), (0, 0)))
    Hp, Wp = H + 2 * padding, W + 2 * padding
    Ho = (Hp - (dilation * (kh - 1) + 1)) // stride + 1
    Wo = (Wp - (dilation * (kw - 1) + 1)) // stride + 1
    taps = []
    for i in range(kh):
        for j in range(kw):
            hi, wi = i * dilation, j * dilation
            taps.append(xp[:, hi:hi + (Ho - 1) * stride + 1:stride,
                              wi:wi + (Wo - 1) * stride + 1:stride, :])
    patches = jnp.stack(taps, axis=3)          # (B, Ho, Wo, kh*kw, C)
    A = patches.reshape(B * Ho * Wo, kh * kw * C)
    return A, (B, Ho, Wo)


def _fold_bn(conv, bn, cout, eps=1e-5):
    if bn is None:
        scale = jnp.ones((cout,), jnp.float32)
        bias = conv["b"] if conv["b"] is not None else jnp.zeros((cout,), jnp.float32)
    else:
        scale = bn["gamma"] / jnp.sqrt(bn["var"] + eps)
        bias = bn["beta"] - bn["mean"] * scale
        if conv["b"] is not None:
            bias = bias + conv["b"] * scale
    return scale, bias


def conv_layer(x, conv, bn=None, act="none", stride=1, padding=0, dilation=1,
               residual=None, alpha=0.25, out_dtype=jnp.bfloat16):
    """x: NHWC.  Returns NHWC.  BN scale is folded into the weight columns."""
    w = conv["w"]                               # (Cout, Cin, kh, kw)
    Cout, Cin, kh, kw = w.shape
    scale, bias = _fold_bn(conv, bn, Cout)
    A, (B, Ho, Wo) = _im2col_nhwc(x, kh, kw, stride, padding, dilation)
    Bm = w.transpose(2, 3, 1, 0).reshape(kh * kw * Cin, Cout) * scale[None, :]
    res2d = None
    if residual is not None:
        res2d = residual.reshape(B * Ho * Wo, Cout)
    out = matmul_bias(A, Bm, bias, act=act, residual=res2d, alpha=alpha,
                      out_dtype=out_dtype)
    return out.reshape(B, Ho, Wo, Cout)


# ----------------------------------------------------------------------------
# MaxPool2d(kernel=3, stride=2, padding=1, ceil_mode=True)  — NHWC
# gridded Pallas kernel over an even/odd parity split of the padded input
# ----------------------------------------------------------------------------
def _maxpool_kernel(ee_ref, eo_ref, oe_ref, oo_ref, o_ref):
    Ho, Wo = o_ref.shape[1], o_ref.shape[2]
    ee = ee_ref[0]
    eo = eo_ref[0]
    oe = oe_ref[0]
    oo = oo_ref[0]

    def win(a, dh, dw):
        return a[dh:dh + Ho, dw:dw + Wo, :]

    r = win(ee, 0, 0)                       # (dy,dx) = (0,0)
    r = jnp.maximum(r, win(eo, 0, 0))       # (0,1)
    r = jnp.maximum(r, win(ee, 0, 1))       # (0,2)
    r = jnp.maximum(r, win(oe, 0, 0))       # (1,0)
    r = jnp.maximum(r, win(oo, 0, 0))       # (1,1)
    r = jnp.maximum(r, win(oe, 0, 1))       # (1,2)
    r = jnp.maximum(r, win(ee, 1, 0))       # (2,0)
    r = jnp.maximum(r, win(eo, 1, 0))       # (2,1)
    r = jnp.maximum(r, win(ee, 1, 1))       # (2,2)
    o_ref[0] = r.astype(o_ref.dtype)


def maxpool_3x3_s2_p1_ceil_nhwc(x):
    B, H, W, C = x.shape
    k, s, p = 3, 2, 1
    Ho = math.ceil((H + 2 * p - k) / s) + 1
    Wo = math.ceil((W + 2 * p - k) / s) + 1
    if (Ho - 1) * s >= H + p:
        Ho -= 1
    if (Wo - 1) * s >= W + p:
        Wo -= 1
    He, We = 2 * Ho + 2, 2 * Wo + 2
    xp = jnp.pad(x, ((0, 0), (p, He - H - p), (p, We - W - p), (0, 0)),
                 constant_values=float("-inf"))
    ee = xp[:, 0::2, 0::2, :]
    eo = xp[:, 0::2, 1::2, :]
    oe = xp[:, 1::2, 0::2, :]
    oo = xp[:, 1::2, 1::2, :]                # each (B, Ho+1, Wo+1, C)

    return pl.pallas_call(
        _maxpool_kernel,
        out_shape=jax.ShapeDtypeStruct((B, Ho, Wo, C), x.dtype),
        grid=(B,),
        in_specs=[pl.BlockSpec((1, Ho + 1, Wo + 1, C),
                               lambda b: (b, 0, 0, 0)) for _ in range(4)],
        out_specs=pl.BlockSpec((1, Ho, Wo, C), lambda b: (b, 0, 0, 0)),
        compiler_params=pltpu.CompilerParams(
            dimension_semantics=("parallel",)),
    )(ee, eo, oe, oo)


# ----------------------------------------------------------------------------
# bilinear upsample, align_corners=False (NCHW, plain-JAX gather glue)
# TODO(synk): legacy F.upsample align_corners semantics not fully resolved.
# ----------------------------------------------------------------------------
def upsample_bilinear_nchw(x, out_h, out_w):
    B, C, H, W = x.shape
    sh, sw = H / out_h, W / out_w
    ys = jnp.clip((jnp.arange(out_h, dtype=jnp.float32) + 0.5) * sh - 0.5, 0.0, H - 1.0)
    xs = jnp.clip((jnp.arange(out_w, dtype=jnp.float32) + 0.5) * sw - 0.5, 0.0, W - 1.0)
    y0 = jnp.floor(ys).astype(jnp.int32); y1 = jnp.minimum(y0 + 1, H - 1)
    x0 = jnp.floor(xs).astype(jnp.int32); x1 = jnp.minimum(x0 + 1, W - 1)
    wy = (ys - y0.astype(jnp.float32))[None, None, :, None]
    wx = (xs - x0.astype(jnp.float32))[None, None, None, :]
    g = lambda yi, xi: x[:, :, yi, :][:, :, :, xi]
    top = g(y0, x0) * (1.0 - wx) + g(y0, x1) * wx
    bot = g(y1, x0) * (1.0 - wx) + g(y1, x1) * wx
    return top * (1.0 - wy) + bot * wy


# ----------------------------------------------------------------------------
# parameters (deterministic synthetic init, matching the module's __init__)
# ----------------------------------------------------------------------------
def init_params(key, layers=(1, 1, 1, 1), num_classes=2):
    keys = iter(jax.random.split(key, 256))

    def conv_p(cout, cin, k, bias):
        w = jax.random.normal(next(keys), (cout, cin, k, k), jnp.float32) * 0.01
        return {"w": w,
                "b": jnp.zeros((cout,), jnp.float32) if bias else None}

    def bn_p(c):
        return {"gamma": jnp.ones((c,), jnp.float32),
                "beta": jnp.zeros((c,), jnp.float32),
                "mean": jnp.zeros((c,), jnp.float32),
                "var": jnp.ones((c,), jnp.float32)}

    params = {"conv1": conv_p(64, 3, 7, False), "bn1": bn_p(64)}
    inplanes, expansion = 64, 4

    def make_layer(planes, blocks, stride, dilation):
        nonlocal inplanes
        out = []
        for i in range(blocks):
            s = stride if i == 0 else 1
            blk = {"conv1": conv_p(planes, inplanes, 1, False), "bn1": bn_p(planes),
                   "conv2": conv_p(planes, planes, 3, False), "bn2": bn_p(planes),
                   "conv3": conv_p(planes * expansion, planes, 1, False),
                   "bn3": bn_p(planes * expansion),
                   "stride": s, "dilation": dilation}
            if i == 0:  # downsample created for every first block in this config
                blk["ds_conv"] = conv_p(planes * expansion, inplanes, 1, False)
                blk["ds_bn"] = bn_p(planes * expansion)
            out.append(blk)
            inplanes = planes * expansion
        return out

    params["layer1"] = make_layer(64, layers[0], 1, 1)
    params["layer2"] = make_layer(128, layers[1], 2, 1)
    params["layer3"] = make_layer(256, layers[2], 1, 2)
    params["layer4"] = make_layer(512, layers[3], 1, 4)

    depth = 512
    params["aspp"] = {
        "conv": conv_p(depth, 2048, 1, True), "bn_x": bn_p(depth),
        "conv2d_0": conv_p(depth, 2048, 1, True), "bn_0": bn_p(depth),
        "conv2d_1": conv_p(depth, 2048, 3, True), "bn_1": bn_p(depth),
        "conv2d_2": conv_p(depth, 2048, 3, True), "bn_2": bn_p(depth),
        "conv2d_3": conv_p(depth, 2048, 3, True), "bn_3": bn_p(depth),
        "bottleneck": conv_p(256, depth * 5, 3, True), "bn": bn_p(256),
        "prelu_alpha": 0.25,
    }
    params["main_classifier"] = conv_p(num_classes, 256, 1, True)
    return params


# ----------------------------------------------------------------------------
# forward (activations NHWC / bf16 between layers)
# ----------------------------------------------------------------------------
def bottleneck_fwd(blk, x):
    s, d = blk["stride"], blk["dilation"]
    out = conv_layer(x, blk["conv1"], blk["bn1"], "relu", stride=s)
    out = conv_layer(out, blk["conv2"], blk["bn2"], "relu",
                     stride=1, padding=d, dilation=d)
    if "ds_conv" in blk:
        residual = conv_layer(x, blk["ds_conv"], blk["ds_bn"], "none", stride=s)
    else:
        residual = x
    # residual add + ReLU fused into the conv3 matmul epilogue
    return conv_layer(out, blk["conv3"], blk["bn3"], "relu", residual=residual)


def aspp_fwd(p, x):
    B, H, W, C = x.shape
    alpha = float(p["prelu_alpha"])
    # image-features branch: AdaptiveAvgPool2d((1,1)) then 1x1 conv (= matmul)
    gm = jnp.mean(x.astype(jnp.float32), axis=(1, 2))        # (B, 2048)
    scale, bias = _fold_bn(p["conv"], p["bn_x"], 512)
    wf = p["conv"]["w"].reshape(512, 2048).T * scale[None, :]
    imf = matmul_bias(gm, wf, bias, act="relu")               # (B, 512)
    # bilinear upsample from 1x1 (align_corners=True) == broadcast
    imf = jnp.broadcast_to(imf[:, None, None, :], (B, H, W, 512))

    out0 = conv_layer(x, p["conv2d_0"], p["bn_0"], "relu")
    out1 = conv_layer(x, p["conv2d_1"], p["bn_1"], "relu", padding=6, dilation=6)
    out2 = conv_layer(x, p["conv2d_2"], p["bn_2"], "relu", padding=12, dilation=12)
    out3 = conv_layer(x, p["conv2d_3"], p["bn_3"], "relu", padding=18, dilation=18)

    # channels-last concat keeps the reduction lane-dense for the bottleneck conv
    cat = jnp.concatenate([imf, out0, out1, out2, out3], axis=-1)
    # 3x3 bottleneck conv with BN + PReLU fused into the matmul epilogue
    fea = conv_layer(cat, p["bottleneck"], p["bn"], "prelu", padding=1,
                     alpha=alpha, out_dtype=jnp.float32)
    return fea


def resnet_forward(params, x):
    B, _, H, W = x.shape
    out = jnp.transpose(x, (0, 2, 3, 1))                      # NCHW -> NHWC
    out = conv_layer(out, params["conv1"], params["bn1"], "relu",
                     stride=2, padding=3)
    out = maxpool_3x3_s2_p1_ceil_nhwc(out)
    for name in ("layer1", "layer2", "layer3", "layer4"):
        for blk in params[name]:
            out = bottleneck_fwd(blk, out)
    fea_nhwc = aspp_fwd(params["aspp"], out)
    y = conv_layer(fea_nhwc, params["main_classifier"], None, "none",
                   out_dtype=jnp.float32)
    fea = jnp.transpose(fea_nhwc, (0, 3, 1, 2))               # NHWC -> NCHW
    y = jnp.transpose(y, (0, 3, 1, 2))
    y = upsample_bilinear_nchw(y, H, W)
    y = _ew_call(jax.nn.sigmoid, y)
    return fea, y


# ----------------------------------------------------------------------------
if __name__ == "__main__":
    key = jax.random.PRNGKey(0)
    pkey, xkey = jax.random.split(key)
    # small shapes: batch=2, 3 input channels, 33x33 spatial (layers=[1,1,1,1])
    params = init_params(pkey, layers=(1, 1, 1, 1), num_classes=2)
    x = jax.random.normal(xkey, (2, 3, 33, 33), jnp.float32)

    fea, y = resnet_forward(params, x)
    jax.block_until_ready(fea)
    jax.block_until_ready(y)

    assert fea.shape == (2, 256, 5, 5)
    assert y.shape == (2, 2, 33, 33)
    print("KERNEL_OK")
</pallas_src>

<mosaic_0001>
module attributes {stable_mosaic.version = 11 : i64} {
  func.func @_mm_kernel(%arg0: i32, %arg1: i32, %arg2: i32, %arg3: memref<128x256xbf16, #tpu.memory_space<vmem>>, %arg4: memref<256x128xbf16, #tpu.memory_space<vmem>>, %arg5: memref<1x128xf32, #tpu.memory_space<vmem>>, %arg6: memref<128x128xbf16, #tpu.memory_space<vmem>>, %arg7: memref<128x128xf32, #tpu.memory_space<vmem>>) attributes {dimension_semantics = [#tpu.dimension_semantics<parallel>, #tpu.dimension_semantics<parallel>, #tpu.dimension_semantics<arbitrary>], iteration_bounds = array<i64: 5, 1, 1>, scalar_prefetch = 0 : i64, scratch_operands = 1 : i64, tpu.core_type = #tpu.core_type<tc>, window_params = [{transform_indices = @transform_0, window_bounds = array<i64: 128, 256>}, {transform_indices = @transform_1, window_bounds = array<i64: 256, 128>}, {transform_indices = @transform_2, window_bounds = array<i64: 1, 128>}, {transform_indices = @transform_3, window_bounds = array<i64: 128, 128>}]} {
    %c0_i32 = arith.constant 0 : i32
    %0 = arith.cmpi eq, %arg2, %c0_i32 : i32
    %1 = arith.extui %0 : i1 to i32
    %c0_i32_0 = arith.constant 0 : i32
    %2 = arith.cmpi ne, %1, %c0_i32_0 : i32
    scf.if %2 {
      %cst_10 = arith.constant 0.000000e+00 : f32
      %12 = vector.broadcast %cst_10 : f32 to vector<128x128xf32>
      %c0_11 = arith.constant 0 : index
      %c0_12 = arith.constant 0 : index
      %13 = vector.load %arg7[%c0_11, %c0_12] : memref<128x128xf32, #tpu.memory_space<vmem>>, vector<128x128xf32>
      tpu.vector_store %arg7[%c0_11, %c0_12], %12 {strides = array<i32>} : memref<128x128xf32, #tpu.memory_space<vmem>>, vector<128x128xf32>,
    } else {
    }
    %c0 = arith.constant 0 : index
    %c0_1 = arith.constant 0 : index
    %3 = vector.load %arg7[%c0, %c0_1] : memref<128x128xf32, #tpu.memory_space<vmem>>, vector<128x128xf32>
    %c0_2 = arith.constant 0 : index
    %c0_3 = arith.constant 0 : index
    %4 = vector.load %arg3[%c0_2, %c0_3] : memref<128x256xbf16, #tpu.memory_space<vmem>>, vector<128x256xbf16>
    %c0_4 = arith.constant 0 : index
    %c0_5 = arith.constant 0 : index
    %5 = vector.load %arg4[%c0_4, %c0_5] : memref<256x128xbf16, #tpu.memory_space<vmem>>, vector<256x128xbf16>
    %cst = arith.constant dense<0.000000e+00> : vector<128x128xf32>
    %6 = tpu.matmul %4, %5, %cst {dimension_numbers = #tpu.dot_dimension_numbers<[1], [0], [0], [1], [0, 0, 1, 1], [], []>} : vector<128x256xbf16>, vector<256x128xbf16>, vector<128x128xf32> -> vector<128x128xf32>
    %7 = arith.addf %3, %6 : vector<128x128xf32>
    %c0_6 = arith.constant 0 : index
    %c0_7 = arith.constant 0 : index
    %8 = vector.load %arg7[%c0_6, %c0_7] : memref<128x128xf32, #tpu.memory_space<vmem>>, vector<128x128xf32>
    tpu.vector_store %arg7[%c0_6, %c0_7], %7 {strides = array<i32>} : memref<128x128xf32, #tpu.memory_space<vmem>>, vector<128x128xf32>,
    %c0_i32_8 = arith.constant 0 : i32
    %9 = arith.cmpi eq, %arg2, %c0_i32_8 : i32
    %10 = arith.extui %9 : i1 to i32
    %c0_i32_9 = arith.constant 0 : i32
    %11 = arith.cmpi ne, %10, %c0_i32_9 : i32
    scf.if %11 {
      %c0_10 = arith.constant 0 : index
      %c0_11 = arith.constant 0 : index
      %12 = vector.load %arg7[%c0_10, %c0_11] : memref<128x128xf32, #tpu.memory_space<vmem>>, vector<128x128xf32>
      %c0_12 = arith.constant 0 : index
      %c0_13 = arith.constant 0 : index
      %13 = vector.load %arg5[%c0_12, %c0_13] : memref<1x128xf32, #tpu.memory_space<vmem>>, vector<1x128xf32>
      %14 = vector.broadcast %13 : vector<1x128xf32> to vector<128x128xf32>
      %15 = arith.addf %12, %14 : vector<128x128xf32>
      %cst_14 = arith.constant 0.000000e+00 : f32
      %16 = vector.broadcast %cst_14 : f32 to vector<128x128xf32>
      %17 = arith.maximumf %15, %16 : vector<128x128xf32>
      %18 = arith.truncf %17 : vector<128x128xf32> to vector<128x128xbf16>
      %c0_15 = arith.constant 0 : index
      %c0_16 = arith.constant 0 : index
      %19 = vector.load %arg6[%c0_15, %c0_16] : memref<128x128xbf16, #tpu.memory_space<vmem>>, vector<128x128xbf16>
      tpu.vector_store %arg6[%c0_15, %c0_16], %18 {strides = array<i32>} : memref<128x128xbf16, #tpu.memory_space<vmem>>, vector<128x128xbf16>,
    } else {
    }
    return
  }
  func.func @transform_0(%arg0: i32, %arg1: i32, %arg2: i32) -> (i32, i32) {
    %c0_i32 = arith.constant 0 : i32
    return %arg0, %arg2 : i32, i32
  }
  func.func @transform_1(%arg0: i32, %arg1: i32, %arg2: i32) -> (i32, i32) {
    %c0_i32 = arith.constant 0 : i32
    return %arg2, %arg1 : i32, i32
  }
  func.func @transform_2(%arg0: i32, %arg1: i32, %arg2: i32) -> (i32, i32) {
    %c0_i32 = arith.constant 0 : i32
    %c0_i32_0 = arith.constant 0 : i32
    return %c0_i32, %arg1 : i32, i32
  }
  func.func @transform_3(%arg0: i32, %arg1: i32, %arg2: i32) -> (i32, i32) {
    %c0_i32 = arith.constant 0 : i32
    return %arg0, %arg1 : i32, i32
  }
}

</mosaic_0001>

<llo_original>
// kernel: tpu_custom_call.1
$region0: #{tpu_custom_call.1}
  #allocation0 [shape = 'u32[]', space=smem, size = 0x4, offset = 0x4, fixed_abs, tag = 'smem constant byte address 0x4 - core index']
  #allocation1 [shape = 'u32[72,128]{1,0:T(1,128)}', space=vmem, size = 0x9000, scoped, tag = 'internal scratch']
  #allocation2 [shape = 'f32[128,128]{1,0:T(8,128)}', space=vmem, size = 0x10000, scoped, tag = 'scratch operand']
  %s0 = inlined_call_operand.hbm [shape: bf16[640,256], index: 0, kind: input, shape index: {}]
  %s1 = inlined_call_operand.hbm [shape: bf16[256,128], index: 1, kind: input, shape index: {}]
  %s2 = inlined_call_operand.vmem [shape: f32[1,128], index: 2, kind: input, shape index: {}]
  %s3 = inlined_call_operand.hbm [shape: bf16[640,128], index: 3, kind: output, shape index: {}]
  %s4 = sld [smem:[#allocation0]]
  $region61: #{tpu_custom_call.1} parent=0
    _
  %s6 = ssub.s32 1, %s4
  %s7 = scalar_select 0, %s6, %s4
  $region1: #{tpu_custom_call.1} parent=0
    #allocation3 [shape = 'u8[131072]{0}', space=vmem, size = 0x20000, scoped, tag = 'input window, operand 0']
    #allocation4 [shape = 's32[2]{0}', space=sflag, size = 0x8, scoped, tag = 'scoped memory for tpu_custom_call.1']
    #allocation5 [shape = 's32[2]{0}', space=sflag, size = 0x8, scoped, tag = 'scoped memory for tpu_custom_call.1']
    #allocation6 [shape = 'u8[65536]{0}', space=vmem, size = 0x10000, scoped, tag = 'input window, operand 1, single buffered']
    #allocation7 [shape = 's32[1]{0}', space=sflag, size = 0x4, scoped, tag = 'scoped memory for tpu_custom_call.1']
    #allocation8 [shape = 'u8[65536]{0}', space=vmem, size = 0x10000, scoped, tag = 'output window, operand 0']
    %8 = vsyncpa [#allocation4], 0
    %s9 = scalar_lea.sflag [#allocation4], 1
    %10 = vsyncpa %s9, 0
    %11 = vsyncpa [#allocation7], 0
    %12 = vsyncpa [#allocation5], 0
    %s13 = scalar_lea.sflag [#allocation5], 1
    %14 = vsyncpa %s13, 0
    loop: start=0, step=1, limit=7
    $region2: #{tpu_custom_call.1} parent=1 // loop_pre_header
      _
    $region3: #{tpu_custom_call.1} parent=1 // loop_header
      %s16 = sphi 0, %s20
      %p17 = scmp.ge.s32.totalorder %s16, 7
      %s23 = sphi 0, %s42
      %s24 = sphi 0, %s38
      %s25 = sphi 0, %s34
      %s26 = sphi 0, %s23
      %s27 = sphi 0, %s24
      %s28 = sphi 0, %s25
      %s29 = sphi 0, %s26
      %s30 = sphi 0, %s27
      %s31 = sphi 0, %s28
      %s47 = sphi 0, %s49
      %s50 = sphi 0, %s47
      %s51 = sphi 0, %s50
      %s67 = sphi 0, %s51
      %s75 = sphi 0, %s77
      %s78 = sphi 0, %s75
      %s79 = sphi 0, %s78
      %s95 = sphi 0, %s79
      %s101 = sphi 0, %s103
      %s104 = sphi 0, %s101
      %s105 = sphi 0, %s104
      %s121 = sphi 0, %s105
      %s129 = sphi 0, %s131
      %s132 = sphi 0, %s129
      %s133 = sphi 0, %s132
      %s149 = sphi 0, %s133
    $region4: #{tpu_custom_call.1} parent=1 // loop_header_branch
      %19 = sbr.rel (%p17) target = $region8
    $region5: #{tpu_custom_call.1} parent=1 // loop_body
      %s21 = ssub.s32 %s16, 1
      %s22 = ssub.s32 %s16, 2
      %s32 = sadd.s32 1, %s25
      %p33 = scmp.ge.s32.totalorder %s32, 1
      %s34 = scalar_select %p33, 0, %s32
      %s35 = sadd.s32 1, %s24
      %s36 = scalar_select %p33, %s35, %s24
      %p37 = scmp.ge.s32.totalorder %s36, 1
      %s38 = scalar_select %p37, 0, %s36
      %s39 = sadd.s32 1, %s23
      %s40 = scalar_select %p37, %s39, %s23
      %p41 = scmp.ge.s32.totalorder %s40, 5
      %s42 = scalar_select %p41, 0, %s40
      %s43 = ssub.s32 %s23, %s42
      %s44 = ssub.s32 %s25, %s34
      %s45 = sor.u32 %s43, %s44
      %p46 = scmp.eq.s32.totalorder %s45, 0
      %s48 = sadd.s32 %s47, 1
      %s49 = scalar_select %p46, %s47, %s48
      %p52 = pneg %p46
      %p53 = scmp.eq.s32.totalorder %s16, 4
      %p54 = por %p52, %p53
      %p55 = scmp.ne.s32.totalorder %s47, %s50
      %p56 = scmp.eq.s32.totalorder %s16, 0
      %p57 = por %p55, %p56
      %p58 = scmp.ne.s32.totalorder %s47, %s50
      %p59 = scmp.eq.s32.totalorder %s21, 4
      %p60 = por %p58, %p59
      %p61 = scmp.ne.s32.totalorder %s50, %s51
      %p62 = scmp.eq.s32.totalorder %s21, 0
      %p63 = por %p61, %p62
      %p64 = scmp.ne.s32.totalorder %s50, %s51
      %p65 = scmp.eq.s32.totalorder %s22, 4
      %p66 = por %p64, %p65
      %p68 = scmp.ne.s32.totalorder %s51, %s67
      %p69 = scmp.eq.s32.totalorder %s22, 0
      %p70 = por %p68, %p69
      %s71 = ssub.s32 %s25, %s34
      %s72 = ssub.s32 %s24, %s38
      %s73 = sor.u32 %s71, %s72
      %p74 = scmp.eq.s32.totalorder %s73, 0
      %s76 = sadd.s32 %s75, 1
      %s77 = scalar_select %p74, %s75, %s76
      %p80 = pneg %p74
      %p81 = scmp.eq.s32.totalorder %s16, 4
      %p82 = por %p80, %p81
      %p83 = scmp.ne.s32.totalorder %s75, %s78
      %p84 = scmp.eq.s32.totalorder %s16, 0
      %p85 = por %p83, %p84
      %p86 = scmp.ne.s32.totalorder %s75, %s78
      %p87 = scmp.eq.s32.totalorder %s21, 4
      %p88 = por %p86, %p87
      %p89 = scmp.ne.s32.totalorder %s78, %s79
      %p90 = scmp.eq.s32.totalorder %s21, 0
      %p91 = por %p89, %p90
      %p92 = scmp.ne.s32.totalorder %s78, %s79
      %p93 = scmp.eq.s32.totalorder %s22, 4
      %p94 = por %p92, %p93
      %p96 = scmp.ne.s32.totalorder %s79, %s95
      %p97 = scmp.eq.s32.totalorder %s22, 0
      %p98 = por %p96, %p97
      %s99 = ssub.s32 %s24, %s38
      %p100 = scmp.eq.s32.totalorder %s99, 0
      %s102 = sadd.s32 %s101, 1
      %s103 = scalar_select %p100, %s101, %s102
      %p106 = pneg %p100
      %p107 = scmp.eq.s32.totalorder %s16, 4
      %p108 = por %p106, %p107
      %p109 = scmp.ne.s32.totalorder %s101, %s104
      %p110 = scmp.eq.s32.totalorder %s16, 0
      %p111 = por %p109, %p110
      %p112 = scmp.ne.s32.totalorder %s101, %s104
      %p113 = scmp.eq.s32.totalorder %s21, 4
      %p114 = por %p112, %p113
      %p115 = scmp.ne.s32.totalorder %s104, %s105
      %p116 = scmp.eq.s32.totalorder %s21, 0
      %p117 = por %p115, %p116
      %p118 = scmp.ne.s32.totalorder %s104, %s105
      %p119 = scmp.eq.s32.totalorder %s22, 4
      %p120 = por %p118, %p119
      %p122 = scmp.ne.s32.totalorder %s105, %s121
      %p123 = scmp.eq.s32.totalorder %s22, 0
      %p124 = por %p122, %p123
      %s125 = ssub.s32 %s23, %s42
      %s126 = ssub.s32 %s24, %s38
      %s127 = sor.u32 %s125, %s126
      %p128 = scmp.eq.s32.totalorder %s127, 0
      %s130 = sadd.s32 %s129, 1
      %s131 = scalar_select %p128, %s129, %s130
      %p134 = pneg %p128
      %p135 = scmp.eq.s32.totalorder %s16, 4
      %p136 = por %p134, %p135
      %p137 = scmp.ne.s32.totalorder %s129, %s132
      %p138 = scmp.eq.s32.totalorder %s16, 0
      %p139 = por %p137, %p138
      %p140 = scmp.ne.s32.totalorder %s129, %s132
      %p141 = scmp.eq.s32.totalorder %s21, 4
      %p142 = por %p140, %p141
      %p143 = scmp.ne.s32.totalorder %s132, %s133
      %p144 = scmp.eq.s32.totalorder %s21, 0
      %p145 = por %p143, %p144
      %p146 = scmp.ne.s32.totalorder %s132, %s133
      %p147 = scmp.eq.s32.totalorder %s22, 4
      %p148 = por %p146, %p147
      %p150 = scmp.ne.s32.totalorder %s133, %s149
      %p151 = scmp.eq.s32.totalorder %s22, 0
      %p152 = por %p150, %p151
      %p153 = scmp.le.s32.totalorder 1, %s16
      %p154 = scmp.lt.s32.totalorder %s16, 6
      %p155 = pnand %p153, %p154
      %p156 = pneg %p155
      // Predicated region
      $region9: #{tpu_custom_call.1} parent=5 // pred_check
        _
      $region10: #{tpu_custom_call.1} parent=5 // pred_check_branch
        %158 = sbr.rel (%p155) target = $region12
      $region11: #{tpu_custom_call.1} parent=5 // pred_region
        %s159 = ssub.s32 %s16, 1
        // Predicated region
        $region13: #{tpu_custom_call.1} parent=11 // pred_check
          %p160 = pneg %p91
        $region14: #{tpu_custom_call.1} parent=11 // pred_check_branch
          %162 = sbr.rel (%p160) target = $region16
        $region15: #{tpu_custom_call.1} parent=11 // pred_region
          %s163 = smul.u32 32, %s28
          %165 = vsyncadd [#allocation7], 0
          %s166 = sadd.s32 %s27, %s163
          %s167 = smul.addr %s166, 4
          %s168 = scalar_lea.hbm %s1, %s167
          %s169 = sshll.u32 %s168, 4
          %s170 = int_to_ptr.hbm [resolvable:$true] %s169
          %s171 = sshll.u32 [#allocation6], 4
          %s172 = int_to_ptr.vmem [resolvable:$true] %s171
          %177 = dma.hbm_to_vmem [thread:$0]  %s170, 2048, %s172, [#allocation7], 64, 64, 4
        $region16: #{tpu_custom_call.1} parent=11 // pred_fallthru
          _
        // Predicated region
        $region17: #{tpu_custom_call.1} parent=11 // pred_check
          %p178 = pneg %p117
        $region18: #{tpu_custom_call.1} parent=11 // pred_check_branch
          %180 = sbr.rel (%p178) target = $region20
        $region19: #{tpu_custom_call.1} parent=11 // pred_region
          %p181 = scmp.lt.s32.totalorder %s27, 0
          %s182 = scalar_select %p181, %s27, 0
          %s183 = scalar_lea.vmem %s2, %s182
        $region20: #{tpu_custom_call.1} parent=11 // pred_fallthru
          _
      $region12: #{tpu_custom_call.1} parent=5 // pred_fallthru
        _
      %p184 = scmp.lt.s32.totalorder %s16, 5
      // Predicated region
      $region21: #{tpu_custom_call.1} parent=5 // pred_check
        %p185 = pneg %p184
      $region22: #{tpu_custom_call.1} parent=5 // pred_check_branch
        %187 = sbr.rel (%p185) target = $region24
      $region23: #{tpu_custom_call.1} parent=5 // pred_region
        // Predicated region
        $region25: #{tpu_custom_call.1} parent=23 // pred_check
          %p188 = pneg %p57
        $region26: #{tpu_custom_call.1} parent=23 // pred_check_branch
          %190 = sbr.rel (%p188) target = $region28
        $region27: #{tpu_custom_call.1} parent=23 // pred_region
          %s191 = sand.u32 %s47, 1
          %s192 = scalar_lea.sflag [#allocation4], %s191
          %s193 = sand.u32 %s47, 1
          %s194 = smul.addr %s193, 128
          %s195 = scalar_lea.vmem [#allocation3], %s194
          %s196 = smul.u32 16, %s23
          %s197 = smul.u32 2, %s25
          %199 = vsyncadd %s192, 0
          %s200 = smul.addr %s196, 2
          %s201 = sadd.s32 %s197, %s200
          %s202 = smul.addr %s201, 4
          %s203 = scalar_lea.hbm %s0, %s202
          %s204 = sshll.u32 %s203, 4
          %s205 = int_to_ptr.hbm [resolvable:$true] %s204
          %s206 = sshll.u32 %s195, 4
          %s207 = int_to_ptr.vmem [resolvable:$true] %s206
          %212 = dma.hbm_to_vmem [thread:$0]  %s205, 2048, %s207, %s192, 128, 128, 8
        $region28: #{tpu_custom_call.1} parent=23 // pred_fallthru
          _
      $region24: #{tpu_custom_call.1} parent=5 // pred_fallthru
        _
      %p213 = scmp.le.s32.totalorder 1, %s16
      %p214 = scmp.lt.s32.totalorder %s16, 6
      %p215 = pnand %p213, %p214
      %p216 = pneg %p215
      // Predicated region
      $region29: #{tpu_custom_call.1} parent=5 // pred_check
        _
      $region30: #{tpu_custom_call.1} parent=5 // pred_check_branch
        %218 = sbr.rel (%p215) target = $region32
      $region31: #{tpu_custom_call.1} parent=5 // pred_region
        %s219 = ssub.s32 %s16, 1
        %s220 = sand.u32 %s50, 1
        %s221 = scalar_lea.sflag [#allocation4], %s220
        %s222 = sand.u32 %s50, 1
        %s223 = smul.addr %s222, 128
        %s224 = scalar_lea.vmem [#allocation3], %s223
        // Predicated region
        $region33: #{tpu_custom_call.1} parent=31 // pred_check
          %p225 = pneg %p63
        $region34: #{tpu_custom_call.1} parent=31 // pred_check_branch
          %227 = sbr.rel (%p225) target = $region36
        $region35: #{tpu_custom_call.1} parent=31 // pred_region
          %229 = dma.done %s221, 2048
        $region36: #{tpu_custom_call.1} parent=31 // pred_fallthru
          _
        // Predicated region
        $region37: #{tpu_custom_call.1} parent=31 // pred_check
          %p230 = pneg %p91
        $region38: #{tpu_custom_call.1} parent=31 // pred_check_branch
          %232 = sbr.rel (%p230) target = $region40
        $region39: #{tpu_custom_call.1} parent=31 // pred_region
          %234 = dma.done [#allocation7], 2048
        $region40: #{tpu_custom_call.1} parent=31 // pred_fallthru
          _
        %s235 = sand.u32 %s50, 1
        %s236 = scalar_lea.sflag [#allocation4], %s235
        %s237 = sand.u32 %s50, 1
        %s238 = smul.addr %s237, 128
        %s239 = scalar_lea.vmem [#allocation3], %s238
        %p240 = pneg %p63
        %p241 = pneg %p60
        %p242 = pneg %p91
        %p243 = pneg %p88
        %p244 = scmp.lt.s32.totalorder %s27, 0
        %s245 = scalar_select %p244, %s27, 0
        %s246 = scalar_lea.vmem %s2, %s245
        %p247 = pneg %p117
        %p248 = pneg %p114
        %p249 = pneg %p145
        %p250 = pneg %p142
        %s251 = sand.u32 %s132, 1
        %s252 = scalar_lea.sflag [#allocation5], %s251
        %s253 = sand.u32 %s132, 1
        %s254 = smul.addr %s253, 64
        %s255 = scalar_lea.vmem [#allocation8], %s254
        %s256 = smul.u32 16, %s26
        %s257 = smul.u32 2, %s28
        %s258 = smul.u32 32, %s28
        %p259 = scmp.lt.s32.totalorder %s27, 0
        %s260 = scalar_select %p259, %s27, 0
        %s261 = scalar_lea.vmem %s2, %s260
        %s262 = smul.u32 16, %s26
        %p263 = scmp.eq.s32.totalorder %s28, 0
        // Predicated region
        $region41: #{tpu_custom_call.1} parent=31 // pred_check
          %p264 = pneg %p263
        $region42: #{tpu_custom_call.1} parent=31 // pred_check_branch
          %266 = sbr.rel (%p264) target = $region44
        $region43: #{tpu_custom_call.1} parent=31 // pred_region
          %267 = vst [vmem:[#allocation2] sm:$0xff] 0.0
          %268 = vst [vmem:[#allocation2 + $0x8] sm:$0xff] 0.0
          %269 = vst [vmem:[#allocation2 + $0x10] sm:$0xff] 0.0
          %270 = vst [vmem:[#allocation2 + $0x18] sm:$0xff] 0.0
          %271 = vst [vmem:[#allocation2 + $0x20] sm:$0xff] 0.0
          %272 = vst [vmem:[#allocation2 + $0x28] sm:$0xff] 0.0
          %273 = vst [vmem:[#allocation2 + $0x30] sm:$0xff] 0.0
          %274 = vst [vmem:[#allocation2 + $0x38] sm:$0xff] 0.0
          %275 = vst [vmem:[#allocation2 + $0x40] sm:$0xff] 0.0
          %276 = vst [vmem:[#allocation2 + $0x48] sm:$0xff] 0.0
          %277 = vst [vmem:[#allocation2 + $0x50] sm:$0xff] 0.0
          %278 = vst [vmem:[#allocation2 + $0x58] sm:$0xff] 0.0
          %279 = vst [vmem:[#allocation2 + $0x60] sm:$0xff] 0.0
          %280 = vst [vmem:[#allocation2 + $0x68] sm:$0xff] 0.0
          %281 = vst [vmem:[#allocation2 + $0x70] sm:$0xff] 0.0
          %282 = vst [vmem:[#allocation2 + $0x78] sm:$0xff] 0.0
        $region44: #{tpu_custom_call.1} parent=31 // pred_fallthru
          _
        %v283 = vld [vmem:[#allocation2] sm:$0xff]
        %v284 = vld [vmem:[#allocation2 + $0x8] sm:$0xff]
        %v285 = vld [vmem:[#allocation2 + $0x10] sm:$0xff]
        %v286 = vld [vmem:[#allocation2 + $0x18] sm:$0xff]
        %v287 = vld [vmem:[#allocation2 + $0x20] sm:$0xff]
        %v288 = vld [vmem:[#allocation2 + $0x28] sm:$0xff]
        %v289 = vld [vmem:[#allocation2 + $0x30] sm:$0xff]
        %v290 = vld [vmem:[#allocation2 + $0x38] sm:$0xff]
        %v291 = vld [vmem:[#allocation2 + $0x40] sm:$0xff]
        %v292 = vld [vmem:[#allocation2 + $0x48] sm:$0xff]
        %v293 = vld [vmem:[#allocation2 + $0x50] sm:$0xff]
        %v294 = vld [vmem:[#allocation2 + $0x58] sm:$0xff]
        %v295 = vld [vmem:[#allocation2 + $0x60] sm:$0xff]
        %v296 = vld [vmem:[#allocation2 + $0x68] sm:$0xff]
        %v297 = vld [vmem:[#allocation2 + $0x70] sm:$0xff]
        %v298 = vld [vmem:[#allocation2 + $0x78] sm:$0xff]
        %v299 = vld [vmem:[%s224] sm:$0xff]
        %v300 = vld [vmem:[%s224 + $0x8] sm:$0xff]
        %v301 = vld [vmem:[%s224 + $0x10] sm:$0xff]
        %v302 = vld [vmem:[%s224 + $0x18] sm:$0xff]
        %v303 = vld [vmem:[%s224 + $0x20] sm:$0xff]
        %v304 = vld [vmem:[%s224 + $0x28] sm:$0xff]
        %v305 = vld [vmem:[%s224 + $0x30] sm:$0xff]
        %v306 = vld [vmem:[%s224 + $0x38] sm:$0xff]
        %v307 = vld [vmem:[%s224 + $0x40] sm:$0xff]
        %v308 = vld [vmem:[%s224 + $0x48] sm:$0xff]
        %v309 = vld [vmem:[%s224 + $0x50] sm:$0xff]
        %v310 = vld [vmem:[%s224 + $0x58] sm:$0xff]
        %v311 = vld [vmem:[%s224 + $0x60] sm:$0xff]
        %v312 = vld [vmem:[%s224 + $0x68] sm:$0xff]
        %v313 = vld [vmem:[%s224 + $0x70] sm:$0xff]
        %v314 = vld [vmem:[%s224 + $0x78] sm:$0xff]
        %v315 = vld [vmem:[#allocation6] sm:$0xf]
        %v316 = vld [vmem:[#allocation6 + $0x4] sm:$0xf]
        %v317 = vld [vmem:[#allocation6 + $0x8] sm:$0xf]
        %v318 = vld [vmem:[#allocation6 + $0xc] sm:$0xf]
        %v319 = vld [vmem:[#allocation6 + $0x10] sm:$0xf]
        %v320 = vld [vmem:[#allocation6 + $0x14] sm:$0xf]
        %v321 = vld [vmem:[#allocation6 + $0x18] sm:$0xf]
        %v322 = vld [vmem:[#allocation6 + $0x1c] sm:$0xf]
        %v323 = vld [vmem:[#allocation6 + $0x20] sm:$0xf]
        %v324 = vld [vmem:[#allocation6 + $0x24] sm:$0xf]
        %v325 = vld [vmem:[#allocation6 + $0x28] sm:$0xf]
        %v326 = vld [vmem:[#allocation6 + $0x2c] sm:$0xf]
        %v327 = vld [vmem:[#allocation6 + $0x30] sm:$0xf]
        %v328 = vld [vmem:[#allocation6 + $0x34] sm:$0xf]
        %v329 = vld [vmem:[#allocation6 + $0x38] sm:$0xf]
        %v330 = vld [vmem:[#allocation6 + $0x3c] sm:$0xf]
        %v331 = vld [vmem:[#allocation6 + $0x40] sm:$0xf]
        %v332 = vld [vmem:[#allocation6 + $0x44] sm:$0xf]
        %v333 = vld [vmem:[#allocation6 + $0x48] sm:$0xf]
        %v334 = vld [vmem:[#allocation6 + $0x4c] sm:$0xf]
        %v335 = vld [vmem:[#allocation6 + $0x50] sm:$0xf]
        %v336 = vld [vmem:[#allocation6 + $0x54] sm:$0xf]
        %v337 = vld [vmem:[#allocation6 + $0x58] sm:$0xf]
        %v338 = vld [vmem:[#allocation6 + $0x5c] sm:$0xf]
        %v339 = vld [vmem:[#allocation6 + $0x60] sm:$0xf]
        %v340 = vld [vmem:[#allocation6 + $0x64] sm:$0xf]
        %v341 = vld [vmem:[#allocation6 + $0x68] sm:$0xf]
        %v342 = vld [vmem:[#allocation6 + $0x6c] sm:$0xf]
        %v343 = vld [vmem:[#allocation6 + $0x70] sm:$0xf]
        %v344 = vld [vmem:[#allocation6 + $0x74] sm:$0xf]
        %v345 = vld [vmem:[#allocation6 + $0x78] sm:$0xf]
        %v346 = vld [vmem:[#allocation6 + $0x7c] sm:$0xf]
        %v363 = vunpack.c.l.b16 %v299
        %v364 = vunpack.c.h.b16 %v299
        %v365 = vunpack.c.l.b16 %v300
        %v366 = vunpack.c.h.b16 %v300
        %v367 = vunpack.c.l.b16 %v301
        %v368 = vunpack.c.h.b16 %v301
        %v369 = vunpack.c.l.b16 %v302
        %v370 = vunpack.c.h.b16 %v302
        %v371 = vunpack.c.l.b16 %v303
        %v372 = vunpack.c.h.b16 %v303
        %v373 = vunpack.c.l.b16 %v304
        %v374 = vunpack.c.h.b16 %v304
        %v375 = vunpack.c.l.b16 %v305
        %v376 = vunpack.c.h.b16 %v305
        %v377 = vunpack.c.l.b16 %v306
        %v378 = vunpack.c.h.b16 %v306
        %v379 = vunpack.c.l.b16 %v307
        %v380 = vunpack.c.h.b16 %v307
        %v381 = vunpack.c.l.b16 %v308
        %v382 = vunpack.c.h.b16 %v308
        %v383 = vunpack.c.l.b16 %v309
        %v384 = vunpack.c.h.b16 %v309
        %v385 = vunpack.c.l.b16 %v310
        %v386 = vunpack.c.h.b16 %v310
        %v387 = vunpack.c.l.b16 %v311
        %v388 = vunpack.c.h.b16 %v311
        %v389 = vunpack.c.l.b16 %v312
        %v390 = vunpack.c.h.b16 %v312
        %v391 = vunpack.c.l.b16 %v313
        %v392 = vunpack.c.h.b16 %v313
        %v393 = vunpack.c.l.b16 %v314
        %v394 = vunpack.c.h.b16 %v314
        %v395 = vpack.c.b16 %v365, %v363
        %v396 = vpack.c.b16 %v366, %v364
        %v397 = vpack.c.b16 %v369, %v367
        %v398 = vpack.c.b16 %v370, %v368
        %v399 = vpack.c.b16 %v373, %v371
        %v400 = vpack.c.b16 %v374, %v372
        %v401 = vpack.c.b16 %v377, %v375
        %v402 = vpack.c.b16 %v378, %v376
        %v403 = vpack.c.b16 %v381, %v379
        %v404 = vpack.c.b16 %v382, %v380
        %v405 = vpack.c.b16 %v385, %v383
        %v406 = vpack.c.b16 %v386, %v384
        %v407 = vpack.c.b16 %v389, %v387
        %v408 = vpack.c.b16 %v390, %v388
        %v409 = vpack.c.b16 %v393, %v391
        %v410 = vpack.c.b16 %v394, %v392
        %v459 = vunpack.c.l.b16 %v315
        %v460 = vunpack.c.l.b16 %v316
        %v461 = vunpack.c.l.b16 %v317
        %v462 = vunpack.c.l.b16 %v318
        %v463 = vunpack.c.l.b16 %v319
        %v464 = vunpack.c.l.b16 %v320
        %v465 = vunpack.c.l.b16 %v321
        %v466 = vunpack.c.l.b16 %v322
        %v467 = vunpack.c.l.b16 %v323
        %v468 = vunpack.c.l.b16 %v324
        %v469 = vunpack.c.l.b16 %v325
        %v470 = vunpack.c.l.b16 %v326
        %v471 = vunpack.c.l.b16 %v327
        %v472 = vunpack.c.l.b16 %v328
        %v473 = vunpack.c.l.b16 %v329
        %v474 = vunpack.c.l.b16 %v330
        %v475 = vunpack.c.l.b16 %v331
        %v476 = vunpack.c.l.b16 %v332
        %v477 = vunpack.c.l.b16 %v333
        %v478 = vunpack.c.l.b16 %v334
        %v479 = vunpack.c.l.b16 %v335
        %v480 = vunpack.c.l.b16 %v336
        %v481 = vunpack.c.l.b16 %v337
        %v482 = vunpack.c.l.b16 %v338
        %v483 = vunpack.c.l.b16 %v339
        %v484 = vunpack.c.l.b16 %v340
        %v485 = vunpack.c.l.b16 %v341
        %v486 = vunpack.c.l.b16 %v342
        %v487 = vunpack.c.l.b16 %v343
        %v488 = vunpack.c.l.b16 %v344
        %v489 = vunpack.c.l.b16 %v345
        %v490 = vunpack.c.l.b16 %v346
        %v491 = vpack.c.b16 %v460, %v459
        %v492 = vpack.c.b16 %v462, %v461
        %v493 = vpack.c.b16 %v464, %v463
        %v494 = vpack.c.b16 %v466, %v465
        %v495 = vpack.c.b16 %v468, %v467
        %v496 = vpack.c.b16 %v470, %v469
        %v497 = vpack.c.b16 %v472, %v471
        %v498 = vpack.c.b16 %v474, %v473
        %v499 = vpack.c.b16 %v476, %v475
        %v500 = vpack.c.b16 %v478, %v477
        %v501 = vpack.c.b16 %v480, %v479
        %v502 = vpack.c.b16 %v482, %v481
        %v503 = vpack.c.b16 %v484, %v483
        %v504 = vpack.c.b16 %v486, %v485
        %v505 = vpack.c.b16 %v488, %v487
        %v506 = vpack.c.b16 %v490, %v489
        %523 = vmatpush.bf16.msra.mxu0 %v498
        %524 = vmatpush.bf16.msra.mxu0 %v497
        %525 = vmatpush.bf16.msra.mxu0 %v496
        %526 = vmatpush.bf16.msra.mxu0 %v495
        %527 = vmatpush.bf16.msra.mxu0 %v494
        %528 = vmatpush.bf16.msra.mxu0 %v493
        %529 = vmatpush.bf16.msra.mxu0 %v492
        %530 = vmatpush.bf16.msra.mxu0 %v491
        %531 = vmatmul.bf16.gmra.mxu0 %v395
        %v532 = vpop.f32.mrf.mxu0
        %v533 = vadd.f32 0.0, %v532
        %v534 = vpop.f32.mrf.mxu0
        %v535 = vadd.f32 0.0, %v534
        %536 = vmatmul.bf16.gmra.mxu0 %v397
        %v537 = vpop.f32.mrf.mxu0
        %v538 = vadd.f32 0.0, %v537
        %v539 = vpop.f32.mrf.mxu0
        %v540 = vadd.f32 0.0, %v539
        %541 = vmatmul.bf16.gmra.mxu0 %v399
        %v542 = vpop.f32.mrf.mxu0
        %v543 = vadd.f32 0.0, %v542
        %v544 = vpop.f32.mrf.mxu0
        %v545 = vadd.f32 0.0, %v544
        %546 = vmatmul.bf16.gmra.mxu0 %v401
        %v547 = vpop.f32.mrf.mxu0
        %v548 = vadd.f32 0.0, %v547
        %v549 = vpop.f32.mrf.mxu0
        %v550 = vadd.f32 0.0, %v549
        %551 = vmatmul.bf16.gmra.mxu0 %v403
        %v552 = vpop.f32.mrf.mxu0
        %v553 = vadd.f32 0.0, %v552
        %v554 = vpop.f32.mrf.mxu0
        %v555 = vadd.f32 0.0, %v554
        %556 = vmatmul.bf16.gmra.mxu0 %v405
        %v557 = vpop.f32.mrf.mxu0
        %v558 = vadd.f32 0.0, %v557
        %v559 = vpop.f32.mrf.mxu0
        %v560 = vadd.f32 0.0, %v559
        %561 = vmatmul.bf16.gmra.mxu0 %v407
        %v562 = vpop.f32.mrf.mxu0
        %v563 = vadd.f32 0.0, %v562
        %v564 = vpop.f32.mrf.mxu0
        %v565 = vadd.f32 0.0, %v564
        %566 = vmatmul.bf16.gmra.mxu0 %v409
        %v567 = vpop.f32.mrf.mxu0
        %v568 = vadd.f32 0.0, %v567
        %v569 = vpop.f32.mrf.mxu0
        %v570 = vadd.f32 0.0, %v569
        %571 = vdwg.mxu0
        %572 = vmatpush.bf16.msra.mxu0 %v506
        %573 = vmatpush.bf16.msra.mxu0 %v505
        %574 = vmatpush.bf16.msra.mxu0 %v504
        %575 = vmatpush.bf16.msra.mxu0 %v503
        %576 = vmatpush.bf16.msra.mxu0 %v502
        %577 = vmatpush.bf16.msra.mxu0 %v501
        %578 = vmatpush.bf16.msra.mxu0 %v500
        %579 = vmatpush.bf16.msra.mxu0 %v499
        %580 = vmatmul.bf16.gmra.mxu0 %v396
        %v581 = vpop.f32.mrf.mxu0
        %v582 = vadd.f32 %v533, %v581
        %v583 = vpop.f32.mrf.mxu0
        %v584 = vadd.f32 %v535, %v583
        %585 = vmatmul.bf16.gmra.mxu0 %v398
        %v586 = vpop.f32.mrf.mxu0
        %v587 = vadd.f32 %v538, %v586
        %v588 = vpop.f32.mrf.mxu0
        %v589 = vadd.f32 %v540, %v588
        %590 = vmatmul.bf16.gmra.mxu0 %v400
        %v591 = vpop.f32.mrf.mxu0
        %v592 = vadd.f32 %v543, %v591
        %v593 = vpop.f32.mrf.mxu0
        %v594 = vadd.f32 %v545, %v593
        %595 = vmatmul.bf16.gmra.mxu0 %v402
        %v596 = vpop.f32.mrf.mxu0
        %v597 = vadd.f32 %v548, %v596
        %v598 = vpop.f32.mrf.mxu0
        %v599 = vadd.f32 %v550, %v598
        %600 = vmatmul.bf16.gmra.mxu0 %v404
        %v601 = vpop.f32.mrf.mxu0
        %v602 = vadd.f32 %v553, %v601
        %v603 = vpop.f32.mrf.mxu0
        %v604 = vadd.f32 %v555, %v603
        %605 = vmatmul.bf16.gmra.mxu0 %v406
        %v606 = vpop.f32.mrf.mxu0
        %v607 = vadd.f32 %v558, %v606
        %v608 = vpop.f32.mrf.mxu0
        %v609 = vadd.f32 %v560, %v608
        %610 = vmatmul.bf16.gmra.mxu0 %v408
        %v611 = vpop.f32.mrf.mxu0
        %v612 = vadd.f32 %v563, %v611
        %v613 = vpop.f32.mrf.mxu0
        %v614 = vadd.f32 %v565, %v613
        %615 = vmatmul.bf16.gmra.mxu0 %v410
        %v616 = vpop.f32.mrf.mxu0
        %v617 = vadd.f32 %v568, %v616
        %v618 = vpop.f32.mrf.mxu0
        %v619 = vadd.f32 %v570, %v618
        %620 = vdwg.mxu0
        %v621 = vadd.f32 %v283, %v582
        %v622 = vadd.f32 %v284, %v584
        %v623 = vadd.f32 %v285, %v587
        %v624 = vadd.f32 %v286, %v589
        %v625 = vadd.f32 %v287, %v592
        %v626 = vadd.f32 %v288, %v594
        %v627 = vadd.f32 %v289, %v597
        %v628 = vadd.f32 %v290, %v599
        %v629 = vadd.f32 %v291, %v602
        %v630 = vadd.f32 %v292, %v604
        %v631 = vadd.f32 %v293, %v607
        %v632 = vadd.f32 %v294, %v609
        %v633 = vadd.f32 %v295, %v612
        %v634 = vadd.f32 %v296, %v614
        %v635 = vadd.f32 %v297, %v617
        %v636 = vadd.f32 %v298, %v619
        %637 = vst [vmem:[#allocation2] sm:$0xff] %v621
        %638 = vst [vmem:[#allocation2 + $0x8] sm:$0xff] %v622
        %639 = vst [vmem:[#allocation2 + $0x10] sm:$0xff] %v623
        %640 = vst [vmem:[#allocation2 + $0x18] sm:$0xff] %v624
        %641 = vst [vmem:[#allocation2 + $0x20] sm:$0xff] %v625
        %642 = vst [vmem:[#allocation2 + $0x28] sm:$0xff] %v626
        %643 = vst [vmem:[#allocation2 + $0x30] sm:$0xff] %v627
        %644 = vst [vmem:[#allocation2 + $0x38] sm:$0xff] %v628
        %645 = vst [vmem:[#allocation2 + $0x40] sm:$0xff] %v629
        %646 = vst [vmem:[#allocation2 + $0x48] sm:$0xff] %v630
        %647 = vst [vmem:[#allocation2 + $0x50] sm:$0xff] %v631
        %648 = vst [vmem:[#allocation2 + $0x58] sm:$0xff] %v632
        %649 = vst [vmem:[#allocation2 + $0x60] sm:$0xff] %v633
        %650 = vst [vmem:[#allocation2 + $0x68] sm:$0xff] %v634
        %651 = vst [vmem:[#allocation2 + $0x70] sm:$0xff] %v635
        %652 = vst [vmem:[#allocation2 + $0x78] sm:$0xff] %v636
        // Predicated region
        $region45: #{tpu_custom_call.1} parent=31 // pred_check
          %p653 = pneg %p263
        $region46: #{tpu_custom_call.1} parent=31 // pred_check_branch
          %655 = sbr.rel (%p653) target = $region48
        $region47: #{tpu_custom_call.1} parent=31 // pred_region
          %v656 = vld [vmem:[#allocation2] sm:$0xff]
          %v657 = vld [vmem:[#allocation2 + $0x8] sm:$0xff]
          %v658 = vld [vmem:[#allocation2 + $0x10] sm:$0xff]
          %v659 = vld [vmem:[#allocation2 + $0x18] sm:$0xff]
          %v660 = vld [vmem:[#allocation2 + $0x20] sm:$0xff]
          %v661 = vld [vmem:[#allocation2 + $0x28] sm:$0xff]
          %v662 = vld [vmem:[#allocation2 + $0x30] sm:$0xff]
          %v663 = vld [vmem:[#allocation2 + $0x38] sm:$0xff]
          %v664 = vld [vmem:[#allocation2 + $0x40] sm:$0xff]
          %v665 = vld [vmem:[#allocation2 + $0x48] sm:$0xff]
          %v666 = vld [vmem:[#allocation2 + $0x50] sm:$0xff]
          %v667 = vld [vmem:[#allocation2 + $0x58] sm:$0xff]
          %v668 = vld [vmem:[#allocation2 + $0x60] sm:$0xff]
          %v669 = vld [vmem:[#allocation2 + $0x68] sm:$0xff]
          %v670 = vld [vmem:[#allocation2 + $0x70] sm:$0xff]
          %v671 = vld [vmem:[#allocation2 + $0x78] sm:$0xff]
          %v672 = vld [vmem:[%s261] sm:$0x1]
          %v674 = vperm.slane %v672, 0
          %v676 = vadd.f32 %v656, %v674
          %v677 = vadd.f32 %v657, %v674
          %v678 = vadd.f32 %v658, %v674
          %v679 = vadd.f32 %v659, %v674
          %v680 = vadd.f32 %v660, %v674
          %v681 = vadd.f32 %v661, %v674
          %v682 = vadd.f32 %v662, %v674
          %v683 = vadd.f32 %v663, %v674
          %v684 = vadd.f32 %v664, %v674
          %v685 = vadd.f32 %v665, %v674
          %v686 = vadd.f32 %v666, %v674
          %v687 = vadd.f32 %v667, %v674
          %v688 = vadd.f32 %v668, %v674
          %v689 = vadd.f32 %v669, %v674
          %v690 = vadd.f32 %v670, %v674
          %v691 = vadd.f32 %v671, %v674
          %v692 = vmax.f32 %v676, 0.0
          %v693 = vmax.f32 %v677, 0.0
          %v694 = vmax.f32 %v678, 0.0
          %v695 = vmax.f32 %v679, 0.0
          %v696 = vmax.f32 %v680, 0.0
          %v697 = vmax.f32 %v681, 0.0
          %v698 = vmax.f32 %v682, 0.0
          %v699 = vmax.f32 %v683, 0.0
          %v700 = vmax.f32 %v684, 0.0
          %v701 = vmax.f32 %v685, 0.0
          %v702 = vmax.f32 %v686, 0.0
          %v703 = vmax.f32 %v687, 0.0
          %v704 = vmax.f32 %v688, 0.0
          %v705 = vmax.f32 %v689, 0.0
          %v706 = vmax.f32 %v690, 0.0
          %v707 = vmax.f32 %v691, 0.0
          %v708 = vpack.c.bf16 %v692, %v692
          %v709 = vpack.c.bf16 %v693, %v693
          %v710 = vpack.c.bf16 %v694, %v694
          %v711 = vpack.c.bf16 %v695, %v695
          %v712 = vpack.c.bf16 %v696, %v696
          %v713 = vpack.c.bf16 %v697, %v697
          %v714 = vpack.c.bf16 %v698, %v698
          %v715 = vpack.c.bf16 %v699, %v699
          %v716 = vpack.c.bf16 %v700, %v700
          %v717 = vpack.c.bf16 %v701, %v701
          %v718 = vpack.c.bf16 %v702, %v702
          %v719 = vpack.c.bf16 %v703, %v703
          %v720 = vpack.c.bf16 %v704, %v704
          %v721 = vpack.c.bf16 %v705, %v705
          %v722 = vpack.c.bf16 %v706, %v706
          %v723 = vpack.c.bf16 %v707, %v707
          %724 = vst [vmem:[%s255] sm:$0xf] %v708
          %725 = vst [vmem:[%s255 + $0x4] sm:$0xf] %v709
          %726 = vst [vmem:[%s255 + $0x8] sm:$0xf] %v710
          %727 = vst [vmem:[%s255 + $0xc] sm:$0xf] %v711
          %728 = vst [vmem:[%s255 + $0x10] sm:$0xf] %v712
          %729 = vst [vmem:[%s255 + $0x14] sm:$0xf] %v713
          %730 = vst [vmem:[%s255 + $0x18] sm:$0xf] %v714
          %731 = vst [vmem:[%s255 + $0x1c] sm:$0xf] %v715
          %732 = vst [vmem:[%s255 + $0x20] sm:$0xf] %v716
          %733 = vst [vmem:[%s255 + $0x24] sm:$0xf] %v717
          %734 = vst [vmem:[%s255 + $0x28] sm:$0xf] %v718
          %735 = vst [vmem:[%s255 + $0x2c] sm:$0xf] %v719
          %736 = vst [vmem:[%s255 + $0x30] sm:$0xf] %v720
          %737 = vst [vmem:[%s255 + $0x34] sm:$0xf] %v721
          %738 = vst [vmem:[%s255 + $0x38] sm:$0xf] %v722
          %739 = vst [vmem:[%s255 + $0x3c] sm:$0xf] %v723
        $region48: #{tpu_custom_call.1} parent=31 // pred_fallthru
          _
        %s740 = sand.u32 %s132, 1
        %s741 = scalar_lea.sflag [#allocation5], %s740
        %s742 = sand.u32 %s132, 1
        %s743 = smul.addr %s742, 64
        %s744 = scalar_lea.vmem [#allocation8], %s743
        // Predicated region
        $region49: #{tpu_custom_call.1} parent=31 // pred_check
          %p745 = pneg %p142
        $region50: #{tpu_custom_call.1} parent=31 // pred_check_branch
          %747 = sbr.rel (%p745) target = $region52
        $region51: #{tpu_custom_call.1} parent=31 // pred_region
          %s748 = smul.u32 16, %s26
          %750 = vsyncadd %s741, 0
          %s751 = sadd.s32 %s27, %s748
          %s752 = smul.addr %s751, 4
          %s753 = scalar_lea.hbm %s3, %s752
          %s754 = sshll.u32 %s744, 4
          %s755 = int_to_ptr.vmem [resolvable:$true] %s754
          %s756 = sshll.u32 %s753, 4
          %s757 = int_to_ptr.hbm [resolvable:$true] %s756
          %762 = dma.vmem_to_hbm [thread:$0]  %s755, 1024, %s757, %s741, 64, 64, 4
        $region52: #{tpu_custom_call.1} parent=31 // pred_fallthru
          _
      $region32: #{tpu_custom_call.1} parent=5 // pred_fallthru
        _
      %p763 = scmp.le.s32.totalorder 2, %s16
      // Predicated region
      $region53: #{tpu_custom_call.1} parent=5 // pred_check
        %p764 = pneg %p763
      $region54: #{tpu_custom_call.1} parent=5 // pred_check_branch
        %766 = sbr.rel (%p764) target = $region56
      $region55: #{tpu_custom_call.1} parent=5 // pred_region
        %s767 = ssub.s32 %s16, 2
        // Predicated region
        $region57: #{tpu_custom_call.1} parent=55 // pred_check
          %p768 = pneg %p148
        $region58: #{tpu_custom_call.1} parent=55 // pred_check_branch
          %770 = sbr.rel (%p768) target = $region60
        $region59: #{tpu_custom_call.1} parent=55 // pred_region
          %s771 = sand.u32 %s133, 1
          %s772 = scalar_lea.sflag [#allocation5], %s771
          %s773 = sand.u32 %s133, 1
          %s774 = smul.addr %s773, 64
          %s775 = scalar_lea.vmem [#allocation8], %s774
          %777 = dma.done %s772, 1024
        $region60: #{tpu_custom_call.1} parent=55 // pred_fallthru
          _
      $region56: #{tpu_custom_call.1} parent=5 // pred_fallthru
        _
    $region6: #{tpu_custom_call.1} parent=1 // loop_footer
      %s20 = sadd.s32 1, %s16
    $region7: #{tpu_custom_call.1} parent=1 // loop_footer_branch
      %15 = sbr.rel target = $region3
    $region8: #{tpu_custom_call.1} parent=1 // loop_exit
      _
    %778 = vsyncpa [#allocation4], 1
    %s779 = scalar_lea.sflag [#allocation4], 1
    %780 = vsyncpa %s779, 1
    %781 = vsyncpa [#allocation7], 1
    %782 = vsyncpa [#allocation5], 1
    %s783 = scalar_lea.sflag [#allocation5], 1
    %784 = vsyncpa %s783, 1

</llo_original>
